<compile_context>
chip_gen: v5e
topology: v5e:2x2
jax: 0.10.0
libtpu: 0.0.40
codegen_flags: <defaults>
</compile_context>

<pallas_src>
import functools

import jax
import jax.numpy as jnp
from jax.experimental import pallas as pl
from jax.experimental.pallas import tpu as pltpu


def _round_up(x, m):
    return (x + m - 1) // m * m


def _lane(n):
    return _round_up(n, 128)


def _vmem_capacity_bytes():
    try:
        return int(pltpu.get_tpu_info().vmem_capacity_bytes)
    except Exception:
        return 64 * 1024 * 1024          # conservative fallback: v7x per-TC capacity


# ---------------------------------------------------------------------------
# Shared compute: drr = bias + sum_m w[m] * gathered slab m; write output rows.
# ---------------------------------------------------------------------------
def _fma_and_store(user_ref, gathered, w_ref, b_ref, out_ref, *, row0, rows):
    """gathered: ref/view of shape (M*rows, D); slab m lives at rows [m*rows, (m+1)*rows)."""
    d = user_ref.shape[1]
    m_sz = w_ref.shape[0]

    ue = user_ref[pl.ds(row0, rows), :].astype(jnp.float32)            # (rows, D)
    drr = jnp.zeros((rows, d), jnp.float32) + b_ref[0]                 # start from bias
    for m in range(m_sz):                                              # unrolled FMA over M
        drr = drr + w_ref[m] * gathered[pl.ds(m * rows, rows), :].astype(jnp.float32)
    ud = ue * drr

    if d % 128 == 0:
        # Lane-aligned segment stores: no (rows, 3D) concat temp, unmasked vst.
        out_ref[pl.ds(row0, rows), 0:d] = ue.astype(out_ref.dtype)
        out_ref[pl.ds(row0, rows), d:2 * d] = ud.astype(out_ref.dtype)
        out_ref[pl.ds(row0, rows), 2 * d:3 * d] = drr.astype(out_ref.dtype)
    else:
        out_ref[pl.ds(row0, rows), :] = jnp.concatenate(
            [ue, ud, drr], axis=-1).astype(out_ref.dtype)


# ---------------------------------------------------------------------------
# Path A: item table resident in VMEM -> gather = dynamic VMEM row copies.
# ---------------------------------------------------------------------------
def _kernel_table_in_vmem(mem_ref, user_ref, tbl_ref, w_ref, b_ref,
                          out_ref, item_buf):
    tb, d = user_ref.shape
    m_sz = w_ref.shape[0]
    base = pl.program_id(0) * tb * m_sz

    @pl.loop(0, tb)
    def _gather(r):
        off = base + r * m_sz
        for m in range(m_sz):                      # M is small & static -> unrolled
            idx = mem_ref[off + m]                 # SMEM scalar read
            item_buf[m * tb + r, :] = tbl_ref[idx, :]   # cheap VMEM row copy, no DMA

    _fma_and_store(user_ref, item_buf, w_ref, b_ref, out_ref, row0=0, rows=tb)


# ---------------------------------------------------------------------------
# Path B: item table in HBM -> per-row DMAs, chunked double-buffer + fat wait.
# ---------------------------------------------------------------------------
def _kernel_table_in_hbm(chunk, mem_ref, user_ref, tbl_hbm, w_ref, b_ref,
                         out_ref, item_buf, dma_sem):
    tb, d = user_ref.shape
    m_sz = w_ref.shape[0]
    nchunks = tb // chunk
    tile_base = pl.program_id(0) * tb * m_sz

    def issue(c, slot):
        base = tile_base + c * chunk * m_sz

        @pl.loop(0, chunk)
        def _issue_rows(r):
            off = base + r * m_sz
            for m in range(m_sz):                  # unrolled over M
                idx = mem_ref[off + m]
                pltpu.make_async_copy(
                    tbl_hbm.at[idx],                       # (D,) row in HBM
                    item_buf.at[slot, m * chunk + r],      # (D,) row in VMEM slot
                    dma_sem.at[slot],
                ).start()

    issue(0, 0)                                    # prime slot 0

    @pl.loop(0, nchunks)
    def _per_chunk(c):
        slot = c & 1

        @pl.when(c + 1 < nchunks)
        def _():
            issue(c + 1, 1 - slot)                 # overlaps this chunk's compute

        # One "fat" wait: DMA semaphores accumulate by bytes transferred, so a
        # descriptor spanning the whole slot covers all chunk*M row copies and
        # is also the write barrier for every gathered row of this slot.
        pltpu.make_async_copy(item_buf.at[slot], item_buf.at[slot],
                              dma_sem.at[slot]).wait()

        _fma_and_store(user_ref, item_buf.at[slot], w_ref, b_ref, out_ref,
                       row0=pl.multiple_of(c * chunk, 8), rows=chunk)


# ---------------------------------------------------------------------------
# Tiling / wrapper
# ---------------------------------------------------------------------------
def _pick_tile_rows(B, M, D, item_itemsize, user_itemsize, max_tile_rows,
                    budget_bytes, scratch_scales_with_tb):
    lane_d, lane_3d = _lane(D), _lane(3 * D)
    per_row = (2 * lane_d * user_itemsize        # user block (double-buffered)
               + 2 * lane_3d * 4)                # f32 out block (double-buffered)
    if scratch_scales_with_tb:
        per_row += M * lane_d * item_itemsize    # (M*tb, D) gather scratch
    tb = max(8, budget_bytes // per_row)
    tb = min(tb, max_tile_rows, _round_up(B, 8))
    if B > 8:
        # >= 2 grid steps -> the single "parallel" axis can split across v7x's
        # two TensorCores (per-step overhead ~0.35us is negligible here).
        tb = min(tb, _round_up(-(-B // 2), 8))
    tb = max(8, tb)
    tb = (tb // 128) * 128 if tb >= 128 else (tb // 8) * 8
    return max(8, tb)


def state_repr_forward(user, memory, params, *, max_tile_rows=1024,
                       force_hbm_gather=False):
    """user: (B,) int ids; memory: (B, M) int ids.  Returns (B, 3*D) float32."""
    user_tbl = params["user_emb"]
    item_tbl = params["item_emb"]
    D = user_tbl.shape[1]
    B, M = memory.shape
    item_rows = item_tbl.shape[0]
    item_itemsize = jnp.dtype(item_tbl.dtype).itemsize
    user_itemsize = jnp.dtype(user_tbl.dtype).itemsize

    # The (B, D) user gather is tiny -> leave it to XLA; the big (B, M, D) item
    # gather is fused into the kernel below.
    user_emb = jnp.take(user_tbl, user, axis=0)

    cap = _vmem_capacity_bytes()
    vmem_budget = min(cap // 3, 40 << 20)          # modest: the op is gather-bound
    lane_d, lane_3d = _lane(D), _lane(3 * D)
    # x2: be conservative about pipeline double-buffering of the invariant block.
    table_vmem_bytes = 2 * _round_up(item_rows, 8) * lane_d * item_itemsize
    table_in_vmem = (not force_hbm_gather) and table_vmem_bytes <= vmem_budget // 2

    if table_in_vmem:
        tile_budget = vmem_budget - table_vmem_bytes
    else:
        tile_budget = vmem_budget - 2 * M * 128 * lane_d * item_itemsize
    tile_budget = max(tile_budget, 1 << 20)

    tb = _pick_tile_rows(B, M, D, item_itemsize, user_itemsize, max_tile_rows,
                         tile_budget, scratch_scales_with_tb=table_in_vmem)
    chunk = min(128, tb)                           # tb % chunk == 0 by construction

    B_pad = _round_up(B, tb)
    pad = B_pad - B
    if pad:
        # Padded rows gather item row 0 (always valid) and are sliced off below.
        user_emb = jnp.pad(user_emb, ((0, pad), (0, 0)))
        memory = jnp.pad(memory, ((0, pad), (0, 0)))
    # TODO(synk): for very large batches, switch the ids to a per-tile SMEM block
    # instead of scalar-prefetching the whole (B_pad*M,) array (SMEM capacity).
    mem_flat = memory.reshape(-1).astype(jnp.int32)

    conv_w = params["conv_w"].reshape(-1).astype(jnp.float32)    # (M,)
    conv_b = params["conv_b"].reshape(-1).astype(jnp.float32)    # (1,)

    if table_in_vmem:
        kernel = _kernel_table_in_vmem
        tbl_spec = pl.BlockSpec((item_rows, D), lambda i, mem: (0, 0))   # VMEM-resident
        scratch = [pltpu.VMEM((M * tb, D), item_tbl.dtype)]
        est = table_vmem_bytes + M * tb * lane_d * item_itemsize
    else:
        kernel = functools.partial(_kernel_table_in_hbm, chunk)
        tbl_spec = pl.BlockSpec(memory_space=pl.ANY)                     # stays in HBM
        scratch = [pltpu.VMEM((2, M * chunk, D), item_tbl.dtype),
                   pltpu.SemaphoreType.DMA((2,))]
        est = 2 * M * chunk * lane_d * item_itemsize
    est += 2 * tb * lane_d * user_itemsize + 2 * tb * lane_3d * 4
    vmem_limit = int(min(cap - (4 << 20), max(32 << 20, est + (8 << 20))))

    grid = (B_pad // tb,)
    out = pl.pallas_call(
        kernel,
        out_shape=jax.ShapeDtypeStruct((B_pad, 3 * D), jnp.float32),
        grid_spec=pltpu.PrefetchScalarGridSpec(
            num_scalar_prefetch=1,                                  # memory ids -> SMEM
            grid=grid,
            in_specs=[
                pl.BlockSpec((tb, D), lambda i, mem: (i, 0)),       # user embeddings
                tbl_spec,                                           # item table
                pl.BlockSpec(memory_space=pltpu.MemorySpace.SMEM),  # conv weight
                pl.BlockSpec(memory_space=pltpu.MemorySpace.SMEM),  # conv bias
            ],
            out_specs=pl.BlockSpec((tb, 3 * D), lambda i, mem: (i, 0)),
            scratch_shapes=scratch,
        ),
        compiler_params=pltpu.CompilerParams(
            dimension_semantics=("parallel",),                      # v7x megacore sharding
            vmem_limit_bytes=vmem_limit),
    )(mem_flat, user_emb, item_tbl, conv_w, conv_b)

    return out[:B]


# ---------------------------------------------------------------------------
# Init + pure-JAX reference (mirrors StateReprModule)
# ---------------------------------------------------------------------------
def init_params(key, user_num, item_num, embedding_dim, memory_size):
    """Deterministic synthetic init mirroring StateReprModule.initialize()."""
    k_user, k_item, k_conv = jax.random.split(key, 3)
    # nn.init.normal_(user_embeddings.weight, std=0.01)
    user_emb = 0.01 * jax.random.normal(
        k_user, (user_num, embedding_dim), dtype=jnp.float32)
    # item_embeddings.weight[-1].zero_() is immediately overwritten by the full
    # normal_ init in the original code, so the whole table ends up normal.
    item_emb = 0.01 * jax.random.normal(
        k_item, (item_num + 1, embedding_dim), dtype=jnp.float32)
    # nn.init.uniform_(drr_ave.weight) -> U[0,1), shape (1, memory_size, 1)
    conv_w = jax.random.uniform(k_conv, (1, memory_size, 1), dtype=jnp.float32)
    # drr_ave.bias.zero_()
    conv_b = jnp.zeros((1,), dtype=jnp.float32)
    return {"user_emb": user_emb, "item_emb": item_emb,
            "conv_w": conv_w, "conv_b": conv_b}


def _reference_forward(user, memory, params):
    """Pure-JAX reference of the PyTorch forward, for correctness check."""
    ue = jnp.take(params["user_emb"], user, axis=0)
    ie = jnp.take(params["item_emb"], memory, axis=0)
    w = params["conv_w"].reshape(-1)                               # (M,)
    drr = jnp.einsum("bmd,m->bd", ie, w) + params["conv_b"][0]
    return jnp.concatenate([ue, ue * drr, drr], axis=1)


if __name__ == "__main__":
    user_num, item_num = 10, 20
    embedding_dim, memory_size = 32, 8
    batch = 30   # not a multiple of the 8-row tile -> exercises the padded last tile

    key = jax.random.PRNGKey(0)
    k_params, k_user, k_mem = jax.random.split(key, 3)

    params = init_params(k_params, user_num, item_num, embedding_dim, memory_size)
    user = jax.random.randint(k_user, (batch,), 0, user_num, dtype=jnp.int32)
    # memory ids in [0, item_num] (item_num is the padding index)
    memory = jax.random.randint(
        k_mem, (batch, memory_size), 0, item_num + 1, dtype=jnp.int32)

    ref = _reference_forward(user, memory, params)

    # Path A: item table staged in VMEM (fits trivially at this size).
    # Small tile cap so the multi-step "parallel" grid path is exercised.
    out_vmem = jax.block_until_ready(
        state_repr_forward(user, memory, params, max_tile_rows=8))
    # Path B: forced HBM row-DMA gather with chunked double-buffer + fat wait.
    out_dma = jax.block_until_ready(
        state_repr_forward(user, memory, params, max_tile_rows=8,
                           force_hbm_gather=True))

    for out in (out_vmem, out_dma):
        assert out.shape == (batch, 3 * embedding_dim), out.shape
        assert jnp.allclose(out, ref, atol=1e-5, rtol=1e-5), "mismatch vs reference"

    print("KERNEL_OK")
</pallas_src>

<mosaic_0001>
module attributes {stable_mosaic.version = 11 : i64} {
  func.func @_kernel_table_in_vmem(%arg0: i32, %arg1: memref<256xi32, #tpu.memory_space<smem>>, %arg2: memref<8x32xf32, #tpu.memory_space<vmem>>, %arg3: memref<21x32xf32, #tpu.memory_space<vmem>>, %arg4: memref<8xf32, #tpu.memory_space<smem>>, %arg5: memref<1xf32, #tpu.memory_space<smem>>, %arg6: memref<8x96xf32, #tpu.memory_space<vmem>>, %arg7: memref<64x32xf32, #tpu.memory_space<vmem>>) attributes {dimension_semantics = [#tpu.dimension_semantics<parallel>], iteration_bounds = array<i64: 4>, scalar_prefetch = 1 : i64, scratch_operands = 1 : i64, tpu.core_type = #tpu.core_type<tc>, window_params = [{transform_indices = @transform_0, window_bounds = array<i64: 8, 32>}, {pipeline_mode = #tpu.pipeline_mode<synchronous>, transform_indices = @transform_1, window_bounds = array<i64: 21, 32>}, {transform_indices = @transform_2, window_bounds = array<i64: 8>}, {transform_indices = @transform_3, window_bounds = array<i64: 1>}, {transform_indices = @transform_4, window_bounds = array<i64: 8, 96>}]} {
    %c8_i32 = arith.constant 8 : i32
    %0 = arith.muli %arg0, %c8_i32 : i32
    %c8_i32_0 = arith.constant 8 : i32
    %1 = arith.muli %0, %c8_i32_0 : i32
    %c0_i32 = arith.constant 0 : i32
    %c8_i32_1 = arith.constant 8 : i32
    %2 = arith.addi %c0_i32, %c8_i32_1 : i32
    %c1_i32 = arith.constant 1 : i32
    scf.for %arg8 = %c0_i32 to %2 step %c1_i32  : i32 {
      %c1_i32_17 = arith.constant 1 : i32
      %51 = arith.muli %arg8, %c1_i32_17 : i32
      %c0_i32_18 = arith.constant 0 : i32
      %52 = arith.addi %c0_i32_18, %51 : i32
      %c8_i32_19 = arith.constant 8 : i32
      %53 = arith.muli %52, %c8_i32_19 : i32
      %54 = arith.addi %1, %53 : i32
      %c0_i32_20 = arith.constant 0 : i32
      %55 = arith.addi %54, %c0_i32_20 : i32
      %56 = arith.index_cast %55 : i32 to index
      %57 = memref.load %arg1[%56] : memref<256xi32, #tpu.memory_space<smem>>
      %58 = arith.index_cast %57 : i32 to index
      %c0_21 = arith.constant 0 : index
      %59 = vector.load %arg3[%58, %c0_21] : memref<21x32xf32, #tpu.memory_space<vmem>>, vector<1x32xf32>
      %60 = vector.shape_cast %59 : vector<1x32xf32> to vector<32xf32>
      %c0_i32_22 = arith.constant 0 : i32
      %61 = arith.addi %c0_i32_22, %52 : i32
      %62 = arith.index_cast %61 : i32 to index
      %c0_23 = arith.constant 0 : index
      %63 = vector.load %arg7[%62, %c0_23] : memref<64x32xf32, #tpu.memory_space<vmem>>, vector<1x32xf32>
      %64 = vector.shape_cast %63 : vector<1x32xf32> to vector<32xf32>
      %65 = vector.shape_cast %60 : vector<32xf32> to vector<1x32xf32>
      tpu.vector_store %arg7[%62, %c0_23], %65 {strides = array<i32>} : memref<64x32xf32, #tpu.memory_space<vmem>>, vector<1x32xf32>,
      %c1_i32_24 = arith.constant 1 : i32
      %66 = arith.addi %54, %c1_i32_24 : i32
      %67 = arith.index_cast %66 : i32 to index
      %68 = memref.load %arg1[%67] : memref<256xi32, #tpu.memory_space<smem>>
      %69 = arith.index_cast %68 : i32 to index
      %c0_25 = arith.constant 0 : index
      %70 = vector.load %arg3[%69, %c0_25] : memref<21x32xf32, #tpu.memory_space<vmem>>, vector<1x32xf32>
      %71 = vector.shape_cast %70 : vector<1x32xf32> to vector<32xf32>
      %c8_i32_26 = arith.constant 8 : i32
      %72 = arith.addi %c8_i32_26, %52 : i32
      %73 = arith.index_cast %72 : i32 to index
      %c0_27 = arith.constant 0 : index
      %74 = vector.load %arg7[%73, %c0_27] : memref<64x32xf32, #tpu.memory_space<vmem>>, vector<1x32xf32>
      %75 = vector.shape_cast %74 : vector<1x32xf32> to vector<32xf32>
      %76 = vector.shape_cast %71 : vector<32xf32> to vector<1x32xf32>
      tpu.vector_store %arg7[%73, %c0_27], %76 {strides = array<i32>} : memref<64x32xf32, #tpu.memory_space<vmem>>, vector<1x32xf32>,
      %c2_i32 = arith.constant 2 : i32
      %77 = arith.addi %54, %c2_i32 : i32
      %78 = arith.index_cast %77 : i32 to index
      %79 = memref.load %arg1[%78] : memref<256xi32, #tpu.memory_space<smem>>
      %80 = arith.index_cast %79 : i32 to index
      %c0_28 = arith.constant 0 : index
      %81 = vector.load %arg3[%80, %c0_28] : memref<21x32xf32, #tpu.memory_space<vmem>>, vector<1x32xf32>
      %82 = vector.shape_cast %81 : vector<1x32xf32> to vector<32xf32>
      %c16_i32 = arith.constant 16 : i32
      %83 = arith.addi %c16_i32, %52 : i32
      %84 = arith.index_cast %83 : i32 to index
      %c0_29 = arith.constant 0 : index
      %85 = vector.load %arg7[%84, %c0_29] : memref<64x32xf32, #tpu.memory_space<vmem>>, vector<1x32xf32>
      %86 = vector.shape_cast %85 : vector<1x32xf32> to vector<32xf32>
      %87 = vector.shape_cast %82 : vector<32xf32> to vector<1x32xf32>
      tpu.vector_store %arg7[%84, %c0_29], %87 {strides = array<i32>} : memref<64x32xf32, #tpu.memory_space<vmem>>, vector<1x32xf32>,
      %c3_i32 = arith.constant 3 : i32
      %88 = arith.addi %54, %c3_i32 : i32
      %89 = arith.index_cast %88 : i32 to index
      %90 = memref.load %arg1[%89] : memref<256xi32, #tpu.memory_space<smem>>
      %91 = arith.index_cast %90 : i32 to index
      %c0_30 = arith.constant 0 : index
      %92 = vector.load %arg3[%91, %c0_30] : memref<21x32xf32, #tpu.memory_space<vmem>>, vector<1x32xf32>
      %93 = vector.shape_cast %92 : vector<1x32xf32> to vector<32xf32>
      %c24_i32 = arith.constant 24 : i32
      %94 = arith.addi %c24_i32, %52 : i32
      %95 = arith.index_cast %94 : i32 to index
      %c0_31 = arith.constant 0 : index
      %96 = vector.load %arg7[%95, %c0_31] : memref<64x32xf32, #tpu.memory_space<vmem>>, vector<1x32xf32>
      %97 = vector.shape_cast %96 : vector<1x32xf32> to vector<32xf32>
      %98 = vector.shape_cast %93 : vector<32xf32> to vector<1x32xf32>
      tpu.vector_store %arg7[%95, %c0_31], %98 {strides = array<i32>} : memref<64x32xf32, #tpu.memory_space<vmem>>, vector<1x32xf32>,
      %c4_i32 = arith.constant 4 : i32
      %99 = arith.addi %54, %c4_i32 : i32
      %100 = arith.index_cast %99 : i32 to index
      %101 = memref.load %arg1[%100] : memref<256xi32, #tpu.memory_space<smem>>
      %102 = arith.index_cast %101 : i32 to index
      %c0_32 = arith.constant 0 : index
      %103 = vector.load %arg3[%102, %c0_32] : memref<21x32xf32, #tpu.memory_space<vmem>>, vector<1x32xf32>
      %104 = vector.shape_cast %103 : vector<1x32xf32> to vector<32xf32>
      %c32_i32 = arith.constant 32 : i32
      %105 = arith.addi %c32_i32, %52 : i32
      %106 = arith.index_cast %105 : i32 to index
      %c0_33 = arith.constant 0 : index
      %107 = vector.load %arg7[%106, %c0_33] : memref<64x32xf32, #tpu.memory_space<vmem>>, vector<1x32xf32>
      %108 = vector.shape_cast %107 : vector<1x32xf32> to vector<32xf32>
      %109 = vector.shape_cast %104 : vector<32xf32> to vector<1x32xf32>
      tpu.vector_store %arg7[%106, %c0_33], %109 {strides = array<i32>} : memref<64x32xf32, #tpu.memory_space<vmem>>, vector<1x32xf32>,
      %c5_i32 = arith.constant 5 : i32
      %110 = arith.addi %54, %c5_i32 : i32
      %111 = arith.index_cast %110 : i32 to index
      %112 = memref.load %arg1[%111] : memref<256xi32, #tpu.memory_space<smem>>
      %113 = arith.index_cast %112 : i32 to index
      %c0_34 = arith.constant 0 : index
      %114 = vector.load %arg3[%113, %c0_34] : memref<21x32xf32, #tpu.memory_space<vmem>>, vector<1x32xf32>
      %115 = vector.shape_cast %114 : vector<1x32xf32> to vector<32xf32>
      %c40_i32 = arith.constant 40 : i32
      %116 = arith.addi %c40_i32, %52 : i32
      %117 = arith.index_cast %116 : i32 to index
      %c0_35 = arith.constant 0 : index
      %118 = vector.load %arg7[%117, %c0_35] : memref<64x32xf32, #tpu.memory_space<vmem>>, vector<1x32xf32>
      %119 = vector.shape_cast %118 : vector<1x32xf32> to vector<32xf32>
      %120 = vector.shape_cast %115 : vector<32xf32> to vector<1x32xf32>
      tpu.vector_store %arg7[%117, %c0_35], %120 {strides = array<i32>} : memref<64x32xf32, #tpu.memory_space<vmem>>, vector<1x32xf32>,
      %c6_i32 = arith.constant 6 : i32
      %121 = arith.addi %54, %c6_i32 : i32
      %122 = arith.index_cast %121 : i32 to index
      %123 = memref.load %arg1[%122] : memref<256xi32, #tpu.memory_space<smem>>
      %124 = arith.index_cast %123 : i32 to index
      %c0_36 = arith.constant 0 : index
      %125 = vector.load %arg3[%124, %c0_36] : memref<21x32xf32, #tpu.memory_space<vmem>>, vector<1x32xf32>
      %126 = vector.shape_cast %125 : vector<1x32xf32> to vector<32xf32>
      %c48_i32 = arith.constant 48 : i32
      %127 = arith.addi %c48_i32, %52 : i32
      %128 = arith.index_cast %127 : i32 to index
      %c0_37 = arith.constant 0 : index
      %129 = vector.load %arg7[%128, %c0_37] : memref<64x32xf32, #tpu.memory_space<vmem>>, vector<1x32xf32>
      %130 = vector.shape_cast %129 : vector<1x32xf32> to vector<32xf32>
      %131 = vector.shape_cast %126 : vector<32xf32> to vector<1x32xf32>
      tpu.vector_store %arg7[%128, %c0_37], %131 {strides = array<i32>} : memref<64x32xf32, #tpu.memory_space<vmem>>, vector<1x32xf32>,
      %c7_i32 = arith.constant 7 : i32
      %132 = arith.addi %54, %c7_i32 : i32
      %133 = arith.index_cast %132 : i32 to index
      %134 = memref.load %arg1[%133] : memref<256xi32, #tpu.memory_space<smem>>
      %135 = arith.index_cast %134 : i32 to index
      %c0_38 = arith.constant 0 : index
      %136 = vector.load %arg3[%135, %c0_38] : memref<21x32xf32, #tpu.memory_space<vmem>>, vector<1x32xf32>
      %137 = vector.shape_cast %136 : vector<1x32xf32> to vector<32xf32>
      %c56_i32 = arith.constant 56 : i32
      %138 = arith.addi %c56_i32, %52 : i32
      %139 = arith.index_cast %138 : i32 to index
      %c0_39 = arith.constant 0 : index
      %140 = vector.load %arg7[%139, %c0_39] : memref<64x32xf32, #tpu.memory_space<vmem>>, vector<1x32xf32>
      %141 = vector.shape_cast %140 : vector<1x32xf32> to vector<32xf32>
      %142 = vector.shape_cast %137 : vector<32xf32> to vector<1x32xf32>
      tpu.vector_store %arg7[%139, %c0_39], %142 {strides = array<i32>} : memref<64x32xf32, #tpu.memory_space<vmem>>, vector<1x32xf32>,
    }
    %c8_i32_2 = arith.constant 8 : i32
    %c0 = arith.constant 0 : index
    %c0_3 = arith.constant 0 : index
    %3 = vector.load %arg2[%c0, %c0_3] : memref<8x32xf32, #tpu.memory_space<vmem>>, vector<8x32xf32>
    %cst = arith.constant 0.000000e+00 : f32
    %4 = vector.broadcast %cst : f32 to vector<8x32xf32>
    %c0_4 = arith.constant 0 : index
    %5 = memref.load %arg5[%c0_4] : memref<1xf32, #tpu.memory_space<smem>>
    %6 = vector.broadcast %5 : f32 to vector<8x32xf32>
    %7 = arith.addf %4, %6 : vector<8x32xf32>
    %c0_5 = arith.constant 0 : index
    %8 = memref.load %arg4[%c0_5] : memref<8xf32, #tpu.memory_space<smem>>
    %c0_6 = arith.constant 0 : index
    %c0_7 = arith.constant 0 : index
    %9 = vector.load %arg7[%c0_6, %c0_7] : memref<64x32xf32, #tpu.memory_space<vmem>>, vector<8x32xf32>
    %10 = vector.broadcast %8 : f32 to vector<8x32xf32>
    %11 = arith.mulf %10, %9 : vector<8x32xf32>
    %12 = arith.addf %7, %11 : vector<8x32xf32>
    %c1 = arith.constant 1 : index
    %13 = memref.load %arg4[%c1] : memref<8xf32, #tpu.memory_space<smem>>
    %c8 = arith.constant 8 : index
    %c0_8 = arith.constant 0 : index
    %14 = vector.load %arg7[%c8, %c0_8] : memref<64x32xf32, #tpu.memory_space<vmem>>, vector<8x32xf32>
    %15 = vector.broadcast %13 : f32 to vector<8x32xf32>
    %16 = arith.mulf %15, %14 : vector<8x32xf32>
    %17 = arith.addf %12, %16 : vector<8x32xf32>
    %c2 = arith.constant 2 : index
    %18 = memref.load %arg4[%c2] : memref<8xf32, #tpu.memory_space<smem>>
    %c16 = arith.constant 16 : index
    %c0_9 = arith.constant 0 : index
    %19 = vector.load %arg7[%c16, %c0_9] : memref<64x32xf32, #tpu.memory_space<vmem>>, vector<8x32xf32>
    %20 = vector.broadcast %18 : f32 to vector<8x32xf32>
    %21 = arith.mulf %20, %19 : vector<8x32xf32>
    %22 = arith.addf %17, %21 : vector<8x32xf32>
    %c3 = arith.constant 3 : index
    %23 = memref.load %arg4[%c3] : memref<8xf32, #tpu.memory_space<smem>>
    %c24 = arith.constant 24 : index
    %c0_10 = arith.constant 0 : index
    %24 = vector.load %arg7[%c24, %c0_10] : memref<64x32xf32, #tpu.memory_space<vmem>>, vector<8x32xf32>
    %25 = vector.broadcast %23 : f32 to vector<8x32xf32>
    %26 = arith.mulf %25, %24 : vector<8x32xf32>
    %27 = arith.addf %22, %26 : vector<8x32xf32>
    %c4 = arith.constant 4 : index
    %28 = memref.load %arg4[%c4] : memref<8xf32, #tpu.memory_space<smem>>
    %c32 = arith.constant 32 : index
    %c0_11 = arith.constant 0 : index
    %29 = vector.load %arg7[%c32, %c0_11] : memref<64x32xf32, #tpu.memory_space<vmem>>, vector<8x32xf32>
    %30 = vector.broadcast %28 : f32 to vector<8x32xf32>
    %31 = arith.mulf %30, %29 : vector<8x32xf32>
    %32 = arith.addf %27, %31 : vector<8x32xf32>
    %c5 = arith.constant 5 : index
    %33 = memref.load %arg4[%c5] : memref<8xf32, #tpu.memory_space<smem>>
    %c40 = arith.constant 40 : index
    %c0_12 = arith.constant 0 : index
    %34 = vector.load %arg7[%c40, %c0_12] : memref<64x32xf32, #tpu.memory_space<vmem>>, vector<8x32xf32>
    %35 = vector.broadcast %33 : f32 to vector<8x32xf32>
    %36 = arith.mulf %35, %34 : vector<8x32xf32>
    %37 = arith.addf %32, %36 : vector<8x32xf32>
    %c6 = arith.constant 6 : index
    %38 = memref.load %arg4[%c6] : memref<8xf32, #tpu.memory_space<smem>>
    %c48 = arith.constant 48 : index
    %c0_13 = arith.constant 0 : index
    %39 = vector.load %arg7[%c48, %c0_13] : memref<64x32xf32, #tpu.memory_space<vmem>>, vector<8x32xf32>
    %40 = vector.broadcast %38 : f32 to vector<8x32xf32>
    %41 = arith.mulf %40, %39 : vector<8x32xf32>
    %42 = arith.addf %37, %41 : vector<8x32xf32>
    %c7 = arith.constant 7 : index
    %43 = memref.load %arg4[%c7] : memref<8xf32, #tpu.memory_space<smem>>
    %c56 = arith.constant 56 : index
    %c0_14 = arith.constant 0 : index
    %44 = vector.load %arg7[%c56, %c0_14] : memref<64x32xf32, #tpu.memory_space<vmem>>, vector<8x32xf32>
    %45 = vector.broadcast %43 : f32 to vector<8x32xf32>
    %46 = arith.mulf %45, %44 : vector<8x32xf32>
    %47 = arith.addf %42, %46 : vector<8x32xf32>
    %48 = arith.mulf %3, %47 : vector<8x32xf32>
    %49 = tpu.concatenate %3, %48, %47 in 1 : vector<8x32xf32>, vector<8x32xf32>, vector<8x32xf32> -> vector<8x96xf32>
    %c0_15 = arith.constant 0 : index
    %c0_16 = arith.constant 0 : index
    %50 = vector.load %arg6[%c0_15, %c0_16] : memref<8x96xf32, #tpu.memory_space<vmem>>, vector<8x96xf32>
    tpu.vector_store %arg6[%c0_15, %c0_16], %49 {strides = array<i32>} : memref<8x96xf32, #tpu.memory_space<vmem>>, vector<8x96xf32>,
    return
  }
  func.func @transform_0(%arg0: i32, %arg1: memref<256xi32, #tpu.memory_space<smem>>) -> (i32, i32) {
    %c0_i32 = arith.constant 0 : i32
    %c0_i32_0 = arith.constant 0 : i32
    return %arg0, %c0_i32 : i32, i32
  }
  func.func @transform_1(%arg0: i32, %arg1: memref<256xi32, #tpu.memory_space<smem>>) -> (i32, i32) {
    %c0_i32 = arith.constant 0 : i32
    %c0_i32_0 = arith.constant 0 : i32
    %c0_i32_1 = arith.constant 0 : i32
    return %c0_i32, %c0_i32_0 : i32, i32
  }
  func.func @transform_2(%arg0: i32, %arg1: memref<256xi32, #tpu.memory_space<smem>>) -> i32 {
    %c0_i32 = arith.constant 0 : i32
    %c0_i32_0 = arith.constant 0 : i32
    return %c0_i32 : i32
  }
  func.func @transform_3(%arg0: i32, %arg1: memref<256xi32, #tpu.memory_space<smem>>) -> i32 {
    %c0_i32 = arith.constant 0 : i32
    %c0_i32_0 = arith.constant 0 : i32
    return %c0_i32 : i32
  }
  func.func @transform_4(%arg0: i32, %arg1: memref<256xi32, #tpu.memory_space<smem>>) -> (i32, i32) {
    %c0_i32 = arith.constant 0 : i32
    %c0_i32_0 = arith.constant 0 : i32
    return %arg0, %c0_i32 : i32, i32
  }
}

</mosaic_0001>

<llo_original>
// kernel: tpu_custom_call.1
$region0: #{tpu_custom_call.1}
  #allocation0 [shape = 'u32[]', space=smem, size = 0x4, offset = 0x4, fixed_abs, tag = 'smem constant byte address 0x4 - core index']
  #allocation1 [shape = 'u32[72,128]{1,0:T(1,128)}', space=vmem, size = 0x9000, scoped, tag = 'internal scratch']
  #allocation2 [shape = 'f32[64,32]{1,0:T(8,128)}', space=vmem, size = 0x8000, scoped, tag = 'scratch operand']
  #allocation3 [shape = 's32[1]{0}', space=sflag, size = 0x4, scoped, tag = 'scoped memory for tpu_custom_call.1']
  #allocation4 [shape = 'u8[1024]{0}', space=smem, size = 0x400, scoped, tag = 'prefetched SMEM operand 0']
  #allocation5 [shape = 'f32[1]{0:T(128)S(6)}', space=smem, size = 0x200, scoped, tag = 'scoped memory for tpu_custom_call.1']
  %s0 = inlined_call_operand.vmem [shape: s32[256], index: 0, kind: input, shape index: {}]
  %s1 = inlined_call_operand.hbm [shape: f32[32,32], index: 1, kind: input, shape index: {}]
  %s2 = inlined_call_operand.hbm [shape: f32[21,32], index: 2, kind: input, shape index: {}]
  %s3 = inlined_call_operand.vmem [shape: f32[8], index: 3, kind: input, shape index: {}]
  %s4 = inlined_call_operand.<no memory space> [shape: f32[1], index: 4, kind: input, shape index: {}]
  %s5 = inlined_call_operand.hbm [shape: f32[32,96], index: 5, kind: output, shape index: {}]
  %s6 = sld [smem:[#allocation0]]
  $region68: #{tpu_custom_call.1} parent=0
    _
  %s8 = ssub.s32 1, %s6
  %s9 = scalar_select 0, %s8, %s6
  %s11 = sshll.u32 %s0, 4
  %s12 = int_to_ptr.vmem [resolvable:$true] %s11
  %14 = dma.vmem_to_smem %s12, 32, [#allocation4], [#allocation3]
  %15 = sst [smem:[#allocation5]] %s4
  %17 = dma.done [#allocation3], 32
  %18 = sfence
  $region1: #{tpu_custom_call.1} parent=0
    #allocation6 [shape = 'u8[8192]{0}', space=vmem, size = 0x2000, scoped, tag = 'input window, operand 1']
    #allocation7 [shape = 's32[2]{0}', space=sflag, size = 0x8, scoped, tag = 'scoped memory for tpu_custom_call.1']
    #allocation8 [shape = 's32[2]{0}', space=sflag, size = 0x8, scoped, tag = 'scoped memory for tpu_custom_call.1']
    #allocation9 [shape = 's32[2]{0}', space=sflag, size = 0x8, scoped, tag = 'scoped memory for tpu_custom_call.1']
    #allocation10 [shape = 'u8[12288]{0}', space=vmem, size = 0x3000, scoped, tag = 'input window, operand 2, single buffered']
    #allocation11 [shape = 's32[1]{0}', space=sflag, size = 0x4, scoped, tag = 'scoped memory for tpu_custom_call.1']
    #allocation12 [shape = 'u8[512]{0}', space=smem, size = 0x200, scoped, tag = 'input window, operand 3, single buffered']
    #allocation13 [shape = 'u8[8192]{0}', space=vmem, size = 0x2000, scoped, tag = 'output window, operand 0']
    %19 = vsyncpa [#allocation7], 0
    %s20 = scalar_lea.sflag [#allocation7], 1
    %21 = vsyncpa %s20, 0
    %22 = vsyncpa [#allocation11], 0
    %23 = vsyncpa [#allocation9], 0
    %24 = vsyncpa [#allocation8], 0
    %s25 = scalar_lea.sflag [#allocation8], 1
    %26 = vsyncpa %s25, 0
    loop: start=0, step=1, limit=6
    $region2: #{tpu_custom_call.1} parent=1 // loop_pre_header
      _
    $region3: #{tpu_custom_call.1} parent=1 // loop_header
      %s28 = sphi 0, %s32
      %p29 = scmp.ge.s32.totalorder %s28, 6
      %s38 = sphi 0, %s40
      %s41 = sphi 0, %s38
      %s42 = sphi 0, %s41
      %s58 = sphi 0, %s42
      %s62 = sphi 0, %s62
      %s64 = sphi 0, %s62
      %s65 = sphi 0, %s64
      %s79 = sphi 0, %s65
      %s83 = sphi 0, %s83
      %s85 = sphi 0, %s83
      %s86 = sphi 0, %s85
      %s100 = sphi 0, %s86
      %s104 = sphi 0, %s104
      %s106 = sphi 0, %s104
      %s107 = sphi 0, %s106
      %s121 = sphi 0, %s107
      %s127 = sphi 0, %s129
      %s130 = sphi 0, %s127
      %s131 = sphi 0, %s130
      %s147 = sphi 0, %s131
    $region4: #{tpu_custom_call.1} parent=1 // loop_header_branch
      %31 = sbr.rel (%p29) target = $region8
    $region5: #{tpu_custom_call.1} parent=1 // loop_body
      %s33 = ssub.s32 %s28, 1
      %s34 = ssub.s32 %s28, 2
      %s35 = sadd.s32 %s28, 1
      %s36 = ssub.s32 %s28, %s35
      %p37 = scmp.eq.s32.totalorder %s36, 0
      %s39 = sadd.s32 %s38, 1
      %s40 = scalar_select %p37, %s38, %s39
      %p43 = pneg %p37
      %p44 = scmp.eq.s32.totalorder %s28, 3
      %p45 = por %p43, %p44
      %p46 = scmp.ne.s32.totalorder %s38, %s41
      %p47 = scmp.eq.s32.totalorder %s28, 0
      %p48 = por %p46, %p47
      %p49 = scmp.ne.s32.totalorder %s38, %s41
      %p50 = scmp.eq.s32.totalorder %s33, 3
      %p51 = por %p49, %p50
      %p52 = scmp.ne.s32.totalorder %s41, %s42
      %p53 = scmp.eq.s32.totalorder %s33, 0
      %p54 = por %p52, %p53
      %p55 = scmp.ne.s32.totalorder %s41, %s42
      %p56 = scmp.eq.s32.totalorder %s34, 3
      %p57 = por %p55, %p56
      %p59 = scmp.ne.s32.totalorder %s42, %s58
      %p60 = scmp.eq.s32.totalorder %s34, 0
      %p61 = por %p59, %p60
      %s63 = sadd.s32 %s62, 1
      %p66 = scmp.eq.s32.totalorder %s28, 3
      %p67 = scmp.ne.s32.totalorder %s62, %s64
      %p68 = scmp.eq.s32.totalorder %s28, 0
      %p69 = por %p67, %p68
      %p70 = scmp.ne.s32.totalorder %s62, %s64
      %p71 = scmp.eq.s32.totalorder %s33, 3
      %p72 = por %p70, %p71
      %p73 = scmp.ne.s32.totalorder %s64, %s65
      %p74 = scmp.eq.s32.totalorder %s33, 0
      %p75 = por %p73, %p74
      %p76 = scmp.ne.s32.totalorder %s64, %s65
      %p77 = scmp.eq.s32.totalorder %s34, 3
      %p78 = por %p76, %p77
      %p80 = scmp.ne.s32.totalorder %s65, %s79
      %p81 = scmp.eq.s32.totalorder %s34, 0
      %p82 = por %p80, %p81
      %s84 = sadd.s32 %s83, 1
      %p87 = scmp.eq.s32.totalorder %s28, 3
      %p88 = scmp.ne.s32.totalorder %s83, %s85
      %p89 = scmp.eq.s32.totalorder %s28, 0
      %p90 = por %p88, %p89
      %p91 = scmp.ne.s32.totalorder %s83, %s85
      %p92 = scmp.eq.s32.totalorder %s33, 3
      %p93 = por %p91, %p92
      %p94 = scmp.ne.s32.totalorder %s85, %s86
      %p95 = scmp.eq.s32.totalorder %s33, 0
      %p96 = por %p94, %p95
      %p97 = scmp.ne.s32.totalorder %s85, %s86
      %p98 = scmp.eq.s32.totalorder %s34, 3
      %p99 = por %p97, %p98
      %p101 = scmp.ne.s32.totalorder %s86, %s100
      %p102 = scmp.eq.s32.totalorder %s34, 0
      %p103 = por %p101, %p102
      %s105 = sadd.s32 %s104, 1
      %p108 = scmp.eq.s32.totalorder %s28, 3
      %p109 = scmp.ne.s32.totalorder %s104, %s106
      %p110 = scmp.eq.s32.totalorder %s28, 0
      %p111 = por %p109, %p110
      %p112 = scmp.ne.s32.totalorder %s104, %s106
      %p113 = scmp.eq.s32.totalorder %s33, 3
      %p114 = por %p112, %p113
      %p115 = scmp.ne.s32.totalorder %s106, %s107
      %p116 = scmp.eq.s32.totalorder %s33, 0
      %p117 = por %p115, %p116
      %p118 = scmp.ne.s32.totalorder %s106, %s107
      %p119 = scmp.eq.s32.totalorder %s34, 3
      %p120 = por %p118, %p119
      %p122 = scmp.ne.s32.totalorder %s107, %s121
      %p123 = scmp.eq.s32.totalorder %s34, 0
      %p124 = por %p122, %p123
      %s125 = ssub.s32 %s28, %s35
      %p126 = scmp.eq.s32.totalorder %s125, 0
      %s128 = sadd.s32 %s127, 1
      %s129 = scalar_select %p126, %s127, %s128
      %p132 = pneg %p126
      %p133 = scmp.eq.s32.totalorder %s28, 3
      %p134 = por %p132, %p133
      %p135 = scmp.ne.s32.totalorder %s127, %s130
      %p136 = scmp.eq.s32.totalorder %s28, 0
      %p137 = por %p135, %p136
      %p138 = scmp.ne.s32.totalorder %s127, %s130
      %p139 = scmp.eq.s32.totalorder %s33, 3
      %p140 = por %p138, %p139
      %p141 = scmp.ne.s32.totalorder %s130, %s131
      %p142 = scmp.eq.s32.totalorder %s33, 0
      %p143 = por %p141, %p142
      %p144 = scmp.ne.s32.totalorder %s130, %s131
      %p145 = scmp.eq.s32.totalorder %s34, 3
      %p146 = por %p144, %p145
      %p148 = scmp.ne.s32.totalorder %s131, %s147
      %p149 = scmp.eq.s32.totalorder %s34, 0
      %p150 = por %p148, %p149
      %p151 = scmp.le.s32.totalorder 1, %s28
      %p152 = scmp.lt.s32.totalorder %s28, 5
      %p153 = pnand %p151, %p152
      %p154 = pneg %p153
      // Predicated region
      $region9: #{tpu_custom_call.1} parent=5 // pred_check
        _
      $region10: #{tpu_custom_call.1} parent=5 // pred_check_branch
        %156 = sbr.rel (%p153) target = $region12
      $region11: #{tpu_custom_call.1} parent=5 // pred_region
        %s157 = ssub.s32 %s28, 1
        // Predicated region
        $region13: #{tpu_custom_call.1} parent=11 // pred_check
          %p158 = pneg %p75
        $region14: #{tpu_custom_call.1} parent=11 // pred_check_branch
          %160 = sbr.rel (%p158) target = $region16
        $region15: #{tpu_custom_call.1} parent=11 // pred_region
          %162 = vsyncadd [#allocation11], 0
          %s163 = sshll.u32 %s2, 4
          %s164 = int_to_ptr.hbm [resolvable:$true] %s163
          %s165 = sshll.u32 [#allocation10], 4
          %s166 = int_to_ptr.vmem [resolvable:$true] %s165
          %171 = dma.hbm_to_vmem [thread:$0]  %s164, 384, %s166, [#allocation11], 128, 128, 8
        $region16: #{tpu_custom_call.1} parent=11 // pred_fallthru
          _
        // Predicated region
        $region17: #{tpu_custom_call.1} parent=11 // pred_check
          %p172 = pneg %p96
        $region18: #{tpu_custom_call.1} parent=11 // pred_check_branch
          %174 = sbr.rel (%p172) target = $region20
        $region19: #{tpu_custom_call.1} parent=11 // pred_region
          %176 = vsyncadd [#allocation9], 0
          %s178 = sshll.u32 %s3, 4
          %s179 = int_to_ptr.vmem [resolvable:$true] %s178
          %181 = dma.vmem_to_smem %s179, 16, [#allocation12], [#allocation9]
        $region20: #{tpu_custom_call.1} parent=11 // pred_fallthru
          _
        // Predicated region
        $region21: #{tpu_custom_call.1} parent=11 // pred_check
          %p182 = pneg %p117
        $region22: #{tpu_custom_call.1} parent=11 // pred_check_branch
          %184 = sbr.rel (%p182) target = $region24
        $region23: #{tpu_custom_call.1} parent=11 // pred_region
          _
        $region24: #{tpu_custom_call.1} parent=11 // pred_fallthru
          _
      $region12: #{tpu_custom_call.1} parent=5 // pred_fallthru
        _
      %p185 = scmp.lt.s32.totalorder %s28, 4
      // Predicated region
      $region25: #{tpu_custom_call.1} parent=5 // pred_check
        %p186 = pneg %p185
      $region26: #{tpu_custom_call.1} parent=5 // pred_check_branch
        %188 = sbr.rel (%p186) target = $region28
      $region27: #{tpu_custom_call.1} parent=5 // pred_region
        // Predicated region
        $region29: #{tpu_custom_call.1} parent=27 // pred_check
          %p189 = pneg %p48
        $region30: #{tpu_custom_call.1} parent=27 // pred_check_branch
          %191 = sbr.rel (%p189) target = $region32
        $region31: #{tpu_custom_call.1} parent=27 // pred_region
          %s192 = sand.u32 %s38, 1
          %s193 = scalar_lea.sflag [#allocation7], %s192
          %s194 = sand.u32 %s38, 1
          %s195 = smul.addr %s194, 8
          %s196 = scalar_lea.vmem [#allocation6], %s195
          %198 = vsyncadd %s193, 0
          %s199 = smul.addr %s28, 8
          %s200 = scalar_lea.hbm %s1, %s199
          %s202 = sshll.u32 %s200, 4
          %s203 = int_to_ptr.hbm [resolvable:$true] %s202
          %s204 = sshll.u32 %s196, 4
          %s205 = int_to_ptr.vmem [resolvable:$true] %s204
          %207 = dma.hbm_to_vmem [thread:$0]  %s203, 128, %s205, %s193
        $region32: #{tpu_custom_call.1} parent=27 // pred_fallthru
          _
      $region28: #{tpu_custom_call.1} parent=5 // pred_fallthru
        _
      %p208 = scmp.le.s32.totalorder 1, %s28
      %p209 = scmp.lt.s32.totalorder %s28, 5
      %p210 = pnand %p208, %p209
      %p211 = pneg %p210
      // Predicated region
      $region33: #{tpu_custom_call.1} parent=5 // pred_check
        _
      $region34: #{tpu_custom_call.1} parent=5 // pred_check_branch
        %213 = sbr.rel (%p210) target = $region36
      $region35: #{tpu_custom_call.1} parent=5 // pred_region
        %s214 = ssub.s32 %s28, 1
        %s215 = sand.u32 %s41, 1
        %s216 = scalar_lea.sflag [#allocation7], %s215
        %s217 = sand.u32 %s41, 1
        %s218 = smul.addr %s217, 8
        %s219 = scalar_lea.vmem [#allocation6], %s218
        // Predicated region
        $region37: #{tpu_custom_call.1} parent=35 // pred_check
          %p220 = pneg %p54
        $region38: #{tpu_custom_call.1} parent=35 // pred_check_branch
          %222 = sbr.rel (%p220) target = $region40
        $region39: #{tpu_custom_call.1} parent=35 // pred_region
          %224 = dma.done %s216, 128
        $region40: #{tpu_custom_call.1} parent=35 // pred_fallthru
          _
        // Predicated region
        $region41: #{tpu_custom_call.1} parent=35 // pred_check
          %p225 = pneg %p75
        $region42: #{tpu_custom_call.1} parent=35 // pred_check_branch
          %227 = sbr.rel (%p225) target = $region44
        $region43: #{tpu_custom_call.1} parent=35 // pred_region
          %229 = dma.done [#allocation11], 384
        $region44: #{tpu_custom_call.1} parent=35 // pred_fallthru
          _
        // Predicated region
        $region45: #{tpu_custom_call.1} parent=35 // pred_check
          %p230 = pneg %p96
        $region46: #{tpu_custom_call.1} parent=35 // pred_check_branch
          %232 = sbr.rel (%p230) target = $region48
        $region47: #{tpu_custom_call.1} parent=35 // pred_region
          %234 = dma.done [#allocation9], 16
        $region48: #{tpu_custom_call.1} parent=35 // pred_fallthru
          _
        %235 = sfence
        %s236 = sand.u32 %s41, 1
        %s237 = scalar_lea.sflag [#allocation7], %s236
        %s238 = sand.u32 %s41, 1
        %s239 = smul.addr %s238, 8
        %s240 = scalar_lea.vmem [#allocation6], %s239
        %p241 = pneg %p54
        %p242 = pneg %p51
        %p243 = pneg %p75
        %p244 = pneg %p72
        %p245 = pneg %p96
        %p246 = pneg %p93
        %p247 = pneg %p117
        %p248 = pneg %p114
        %p249 = pneg %p143
        %p250 = pneg %p140
        %s251 = sand.u32 %s130, 1
        %s252 = scalar_lea.sflag [#allocation8], %s251
        %s253 = sand.u32 %s130, 1
        %s254 = smul.addr %s253, 8
        %s255 = scalar_lea.vmem [#allocation13], %s254
        %s256 = smul.u32 %s33, 64
        loop: start=0, step=1, limit=8
        $region49: #{tpu_custom_call.1} parent=35 // loop_pre_header
          _
        $region50: #{tpu_custom_call.1} parent=35 // loop_header
          %s258 = sphi 0, %s262
          %p259 = scmp.ge.s32.totalorder %s258, 8
        $region51: #{tpu_custom_call.1} parent=35 // loop_header_branch
          %261 = sbr.rel (%p259) target = $region55
        $region52: #{tpu_custom_call.1} parent=35 // loop_body
          %s263 = smul.u32 %s258, 8
          %s264 = sadd.s32 %s256, %s263
          %s265 = sld [smem:[#allocation4 + %s264]]
          %s266 = scalar_lea.vmem [#allocation10], %s265
          %v267 = vld [vmem:[%s266] sm:$0x1]
          %s268 = scalar_lea.vmem [#allocation2], %s258
          %vm269 = vcmask 253952
          %270 = vst.msk [vmem:[%s268] sm:$0x1] %vm269, %v267
          %s271 = sadd.s32 %s264, 1
          %s272 = sld [smem:[#allocation4 + %s271]]
          %s273 = scalar_lea.vmem [#allocation10], %s272
          %v274 = vld [vmem:[%s273] sm:$0x1]
          %s275 = sadd.s32 %s258, 8
          %s276 = scalar_lea.vmem [#allocation2], %s275
          %277 = vst.msk [vmem:[%s276] sm:$0x1] %vm269, %v274
          %s278 = sadd.s32 %s264, 2
          %s279 = sld [smem:[#allocation4 + %s278]]
          %s280 = scalar_lea.vmem [#allocation10], %s279
          %v281 = vld [vmem:[%s280] sm:$0x1]
          %s282 = sadd.s32 %s258, 16
          %s283 = scalar_lea.vmem [#allocation2], %s282
          %284 = vst.msk [vmem:[%s283] sm:$0x1] %vm269, %v281
          %s285 = sadd.s32 %s264, 3
          %s286 = sld [smem:[#allocation4 + %s285]]
          %s287 = scalar_lea.vmem [#allocation10], %s286
          %v288 = vld [vmem:[%s287] sm:$0x1]
          %s289 = sadd.s32 %s258, 24
          %s290 = scalar_lea.vmem [#allocation2], %s289
          %291 = vst.msk [vmem:[%s290] sm:$0x1] %vm269, %v288
          %s292 = sadd.s32 %s264, 4
          %s293 = sld [smem:[#allocation4 + %s292]]
          %s294 = scalar_lea.vmem [#allocation10], %s293
          %v295 = vld [vmem:[%s294] sm:$0x1]
          %s296 = sadd.s32 %s258, 32
          %s297 = scalar_lea.vmem [#allocation2], %s296
          %298 = vst.msk [vmem:[%s297] sm:$0x1] %vm269, %v295
          %s299 = sadd.s32 %s264, 5
          %s300 = sld [smem:[#allocation4 + %s299]]
          %s301 = scalar_lea.vmem [#allocation10], %s300
          %v302 = vld [vmem:[%s301] sm:$0x1]
          %s303 = sadd.s32 %s258, 40
          %s304 = scalar_lea.vmem [#allocation2], %s303
          %305 = vst.msk [vmem:[%s304] sm:$0x1] %vm269, %v302
          %s306 = sadd.s32 %s264, 6
          %s307 = sld [smem:[#allocation4 + %s306]]
          %s308 = scalar_lea.vmem [#allocation10], %s307
          %v309 = vld [vmem:[%s308] sm:$0x1]
          %s310 = sadd.s32 %s258, 48
          %s311 = scalar_lea.vmem [#allocation2], %s310
          %312 = vst.msk [vmem:[%s311] sm:$0x1] %vm269, %v309
          %s313 = sadd.s32 %s264, 7
          %s314 = sld [smem:[#allocation4 + %s313]]
          %s315 = scalar_lea.vmem [#allocation10], %s314
          %v316 = vld [vmem:[%s315] sm:$0x1]
          %s317 = sadd.s32 %s258, 56
          %s318 = scalar_lea.vmem [#allocation2], %s317
          %319 = vst.msk [vmem:[%s318] sm:$0x1] %vm269, %v316
        $region53: #{tpu_custom_call.1} parent=35 // loop_footer
          %s262 = sadd.s32 1, %s258
        $region54: #{tpu_custom_call.1} parent=35 // loop_footer_branch
          %257 = sbr.rel target = $region50
        $region55: #{tpu_custom_call.1} parent=35 // loop_exit
          _
        %v320 = vld [vmem:[%s219] sm:$0xff]
        %s321 = sld [smem:[#allocation5]]
        %v322 = vstv %s321
        %v323 = vadd.f32 %v322, 0.0
        %s324 = sld [smem:[#allocation12]]
        %v325 = vld [vmem:[#allocation2] sm:$0xff]
        %v326 = vstv %s324
        %v327 = vmul.f32 %v326, %v325
        %v328 = vadd.f32 %v323, %v327
        %s329 = sld [smem:[#allocation12 + $0x1]]
        %v330 = vld [vmem:[#allocation2 + $0x8] sm:$0xff]
        %v331 = vstv %s329
        %v332 = vmul.f32 %v331, %v330
        %v333 = vadd.f32 %v328, %v332
        %s334 = sld [smem:[#allocation12 + $0x2]]
        %v335 = vld [vmem:[#allocation2 + $0x10] sm:$0xff]
        %v336 = vstv %s334
        %v337 = vmul.f32 %v336, %v335
        %v338 = vadd.f32 %v333, %v337
        %s339 = sld [smem:[#allocation12 + $0x3]]
        %v340 = vld [vmem:[#allocation2 + $0x18] sm:$0xff]
        %v341 = vstv %s339
        %v342 = vmul.f32 %v341, %v340
        %v343 = vadd.f32 %v338, %v342
        %s344 = sld [smem:[#allocation12 + $0x4]]
        %v345 = vld [vmem:[#allocation2 + $0x20] sm:$0xff]
        %v346 = vstv %s344
        %v347 = vmul.f32 %v346, %v345
        %v348 = vadd.f32 %v343, %v347
        %s349 = sld [smem:[#allocation12 + $0x5]]
        %v350 = vld [vmem:[#allocation2 + $0x28] sm:$0xff]
        %v351 = vstv %s349
        %v352 = vmul.f32 %v351, %v350
        %v353 = vadd.f32 %v348, %v352
        %s354 = sld [smem:[#allocation12 + $0x6]]
        %v355 = vld [vmem:[#allocation2 + $0x30] sm:$0xff]
        %v356 = vstv %s354
        %v357 = vmul.f32 %v356, %v355
        %v358 = vadd.f32 %v353, %v357
        %s359 = sld [smem:[#allocation12 + $0x7]]
        %v360 = vld [vmem:[#allocation2 + $0x38] sm:$0xff]
        %v361 = vstv %s359
        %v362 = vmul.f32 %v361, %v360
        %v363 = vadd.f32 %v358, %v362
        %v364 = vmul.f32 %v320, %v363
        %366 = vrot.lane.b32.xlu0 %v364, 32
        %v367 = vpop.permute.xlu0 %366
        %370 = vrot.lane.b32.xlu0 %v363, 64
        %v371 = vpop.permute.xlu0 %370
        %vm373 = vcmask 261120
        %v374 = vsel %vm373, %v320, %v367
        %vm375 = vcmask 523264
        %v376 = vsel %vm375, %v374, %v371
        %vm377 = vcmask 785408
        %378 = vst.msk [vmem:[%s255] sm:$0xff] %vm377, %v376
        %s379 = sand.u32 %s130, 1
        %s380 = scalar_lea.sflag [#allocation8], %s379
        %s381 = sand.u32 %s130, 1
        %s382 = smul.addr %s381, 8
        %s383 = scalar_lea.vmem [#allocation13], %s382
        // Predicated region
        $region56: #{tpu_custom_call.1} parent=35 // pred_check
          %p384 = pneg %p140
        $region57: #{tpu_custom_call.1} parent=35 // pred_check_branch
          %386 = sbr.rel (%p384) target = $region59
        $region58: #{tpu_custom_call.1} parent=35 // pred_region
          %388 = vsyncadd %s380, 0
          %s389 = smul.addr %s33, 8
          %s390 = scalar_lea.hbm %s5, %s389
          %s392 = sshll.u32 %s383, 4
          %s393 = int_to_ptr.vmem [resolvable:$true] %s392
          %s394 = sshll.u32 %s390, 4
          %s395 = int_to_ptr.hbm [resolvable:$true] %s394
          %397 = dma.vmem_to_hbm [thread:$0]  %s393, 128, %s395, %s380
        $region59: #{tpu_custom_call.1} parent=35 // pred_fallthru
          _
      $region36: #{tpu_custom_call.1} parent=5 // pred_fallthru
        _
      %p398 = scmp.le.s32.totalorder 2, %s28
      // Predicated region
      $region60: #{tpu_custom_call.1} parent=5 // pred_check
        %p399 = pneg %p398
      $region61: #{tpu_custom_call.1} parent=5 // pred_check_branch
        %401 = sbr.rel (%p399) target = $region63
      $region62: #{tpu_custom_call.1} parent=5 // pred_region
        %s402 = ssub.s32 %s28, 2
        // Predicated region
        $region64: #{tpu_custom_call.1} parent=62 // pred_check
          %p403 = pneg %p146
        $region65: #{tpu_custom_call.1} parent=62 // pred_check_branch
          %405 = sbr.rel (%p403) target = $region67
        $region66: #{tpu_custom_call.1} parent=62 // pred_region
          %s406 = sand.u32 %s131, 1
          %s407 = scalar_lea.sflag [#allocation8], %s406
          %s408 = sand.u32 %s131, 1
          %s409 = smul.addr %s408, 8
          %s410 = scalar_lea.vmem [#allocation13], %s409
          %412 = dma.done %s407, 128
        $region67: #{tpu_custom_call.1} parent=62 // pred_fallthru
          _
      $region63: #{tpu_custom_call.1} parent=5 // pred_fallthru
        _
    $region6: #{tpu_custom_call.1} parent=1 // loop_footer
      %s32 = sadd.s32 1, %s28
    $region7: #{tpu_custom_call.1} parent=1 // loop_footer_branch
      %27 = sbr.rel target = $region3
    $region8: #{tpu_custom_call.1} parent=1 // loop_exit
      _
    %413 = vsyncpa [#allocation7], 1
    %s414 = scalar_lea.sflag [#allocation7], 1
    %415 = vsyncpa %s414, 1
    %416 = vsyncpa [#allocation11], 1
    %417 = vsyncpa [#allocation8], 1
    %s418 = scalar_lea.sflag [#allocation8], 1
    %419 = vsyncpa %s418, 1
    %420 = vsyncpa [#allocation9], 1
    %s421 = scalar_lea.sflag [#allocation9], 1
    %422 = vsyncpa %s421, 1

</llo_original>
